<compile_context>
chip_gen: v5e
topology: v5e:2x2
jax: 0.10.0
libtpu: 0.0.40
codegen_flags: <defaults>
</compile_context>

<pallas_src>
import functools

import jax
import jax.numpy as jnp
from jax import lax
from jax.experimental import pallas as pl
from jax.experimental.pallas import tpu as pltpu

_BIG = 1e30  # masks padded codebook rows out of the argmin


def _round_up(a, b):
    return ((a + b - 1) // b) * b


def _vq_kernel(x_ref, ne_ref, e2_ref, idx_ref, sse_ref, *,
               hw_valid, tile_hw, k_pad):
    """One (batch b, pixel-tile i) step of the transposed VQ problem.

    x_ref  : (D, tile_hw)   pixel tile for batch b (pixels on the lane axis)
    ne_ref : (K_pad, D)     codebook pre-scaled by -2 (wrapper-side)
    e2_ref : (K_pad, 1)     ||e_a||^2 per code; padded codes hold +BIG
    idx_ref: (1, tile_hw)   int32 nearest-code index per pixel (lane dense)
    sse_ref: (1, 1, 1)      per-batch resident SSE accumulator
    """
    i = pl.program_id(1)

    @pl.when(i == 0)
    def _():
        sse_ref[...] = jnp.zeros_like(sse_ref)

    x = x_ref[...].astype(jnp.float32)        # (D, T)
    ne = ne_ref[...].astype(jnp.float32)      # (K_pad, D) == -2 * E
    e2 = e2_ref[...].astype(jnp.float32)      # (K_pad, 1)

    # score[a, p] = ||e_a||^2 - 2 e_a . x_p   (||x_p||^2 dropped: per-pixel const)
    score = e2 + jnp.dot(ne, x, preferred_element_type=jnp.float32)   # (K_pad, T)

    # First-occurrence argmin over the code (sublane) axis -> lane-dense (1, T).
    min_s = jnp.min(score, axis=0, keepdims=True)                     # (1, T)
    iota_a = lax.broadcasted_iota(jnp.int32, score.shape, 0)
    idx = jnp.min(jnp.where(score == min_s, iota_a, k_pad),
                  axis=0, keepdims=True)                              # (1, T) int32
    idx_ref[...] = idx

    # Analytic SSE: ||x_p - e_nearest||^2 = ||x_p||^2 + min_score_p.
    contrib = jnp.sum(x * x, axis=0, keepdims=True) + min_s           # (1, T)

    if hw_valid % tile_hw == 0:
        # No padded pixels anywhere: unconditional fast path.
        sse_ref[...] += jnp.sum(contrib)
    else:
        last = pl.num_programs(1) - 1

        @pl.when(i != last)
        def _():
            sse_ref[...] += jnp.sum(contrib)

        @pl.when(i == last)
        def _():
            lane = lax.broadcasted_iota(jnp.int32, contrib.shape, 1)
            valid = (i * tile_hw + lane) < hw_valid
            sse_ref[...] += jnp.sum(jnp.where(valid, contrib, 0.0))


def vector_quantizer(x_nchw, embedding, commitment_cost):
    """Forward pass of VectorQuantizer.

    Returns (loss, quantized_nchw, perplexity, encodings) with the same forward
    values as the torch module.
    """
    B, C, H, W = x_nchw.shape
    D = C
    K, Dk = embedding.shape
    assert Dk == D
    HW = H * W
    N = B * HW

    emb = embedding.astype(jnp.float32)

    # Transposed formulation: keep NCHW, merge spatial dims -> (B, D, HW).
    # Pixels land on the 128-lane axis, so x tiles, the score plane and the
    # index output are lane-dense and the wrapper never permutes the input.
    x3 = x_nchw.astype(jnp.float32).reshape(B, D, HW)

    # --- codebook: codes on sublanes, pre-scaled by -2, e2 hoisted -----------
    K_pad = max(128, _round_up(K, 128))
    neg2e = jnp.zeros((K_pad, D), jnp.float32).at[:K, :].set(-2.0 * emb)
    e2 = jnp.sum(emb * emb, axis=1)
    e2_col = jnp.concatenate(
        [e2, jnp.full((K_pad - K,), _BIG, jnp.float32)])[:, None]     # (K_pad, 1)

    # --- tile selection from the true per-step VMEM footprint ----------------
    # Dominant term: ~4 live (K_pad, tile_hw) f32 intermediates (score, iota,
    # where-select, ...) + double-buffered x tile.  Budget kept well under
    # v7x's 64 MiB physical VMEM; v5e/v6e (128 MiB) fit trivially.
    bytes_per_px = 4 * K_pad * 4 + 2 * _round_up(D, 8) * 4 + 64
    budget = 24 * 1024 * 1024
    tile_cap = max(128, (budget // bytes_per_px) // 128 * 128)
    tile_hw = min(_round_up(HW, 128), tile_cap, 4096)
    steps = -(-HW // tile_hw)
    HW_pad = steps * tile_hw
    if HW_pad != HW:
        x3 = jnp.pad(x3, ((0, 0), (0, 0), (0, HW_pad - HW)))

    est_vmem = (bytes_per_px * tile_hw
                + 2 * K_pad * max(128, _round_up(D, 128)) * 4
                + (1 << 20))
    vmem_limit = int(min(60 * 2 ** 20, max(16 * 2 ** 20, 2 * est_vmem)))

    # TODO(synk): for very large codebooks (K_pad >= ~2048) tile K inside the
    # kernel (running min / running argmin) to bound the (K_pad, tile_hw)
    # score plane on v7x; unnecessary at these sizes.

    kernel = functools.partial(_vq_kernel, hw_valid=HW, tile_hw=tile_hw,
                               k_pad=K_pad)

    idx_out, sse = pl.pallas_call(
        kernel,
        out_shape=(
            jax.ShapeDtypeStruct((B, steps, 1, tile_hw), jnp.int32),   # indices
            jax.ShapeDtypeStruct((B, 1, 1), jnp.float32),              # per-batch SSE
        ),
        grid_spec=pltpu.PrefetchScalarGridSpec(
            num_scalar_prefetch=0,
            grid=(B, steps),
            in_specs=[
                pl.BlockSpec((None, D, tile_hw), lambda b, i: (b, 0, i)),  # x tile
                pl.BlockSpec((K_pad, D), lambda b, i: (0, 0)),             # -2*E
                pl.BlockSpec((K_pad, 1), lambda b, i: (0, 0)),             # ||e||^2
            ],
            out_specs=[
                pl.BlockSpec((None, None, 1, tile_hw), lambda b, i: (b, i, 0, 0)),
                pl.BlockSpec((1, 1, 1), lambda b, i: (b, 0, 0)),           # accumulator
            ],
        ),
        compiler_params=pltpu.CompilerParams(
            dimension_semantics=("parallel", "arbitrary"),
            vmem_limit_bytes=vmem_limit),
    )(x3, neg2e, e2_col)

    # --- wrapper-side reconstruction (dense XLA ops only) --------------------
    idx_rows = idx_out.reshape(B, HW_pad)[:, :HW].reshape(-1)          # (N,) int32
    encodings = jax.nn.one_hot(idx_rows, K, dtype=jnp.float32)         # (N, K)
    q_rows = jnp.take(emb, idx_rows, axis=0)                           # (N, D) gather
    quant_nchw = jnp.transpose(q_rows.reshape(B, H, W, D), (0, 3, 1, 2))

    mse = jnp.sum(sse) / (N * D)
    # e_latent_loss == q_latent_loss in the forward pass
    loss = mse + commitment_cost * mse

    avg_probs = jnp.mean(encodings, axis=0)                            # (K,)
    perplexity = jnp.exp(-jnp.sum(avg_probs * jnp.log(avg_probs + 1e-10)))

    # TODO(synk): straight-through gradient (inputs + (q - inputs).detach()) is
    # a backward-pass concern; forward values are identical.
    return loss, quant_nchw, perplexity, encodings


def _vq_reference(x_nchw, emb, cc):
    """Pure-JAX reference mirroring the torch forward, for validation."""
    x = jnp.transpose(x_nchw, (0, 2, 3, 1))
    flat = x.reshape(-1, emb.shape[1])
    d = (jnp.sum(flat ** 2, 1, keepdims=True) + jnp.sum(emb ** 2, 1)
         - 2.0 * flat @ emb.T)
    idx = jnp.argmin(d, axis=1)
    enc = jax.nn.one_hot(idx, emb.shape[0], dtype=jnp.float32)
    q = enc @ emb
    mse = jnp.mean((q - flat) ** 2)
    loss = mse + cc * mse
    q_nchw = jnp.transpose(q.reshape(x.shape), (0, 3, 1, 2))
    avg = jnp.mean(enc, 0)
    perp = jnp.exp(-jnp.sum(avg * jnp.log(avg + 1e-10)))
    return loss, q_nchw, perp, enc


if __name__ == "__main__":
    # Small deterministic setup consistent with the module:
    #   num_embeddings=8, embedding_dim=4, commitment_cost=0.25
    #   input x: NCHW = (2, 4, 16, 16)  -> N = 512 flattened vectors
    num_embeddings = 8
    embedding_dim = 4
    commitment_cost = 0.25

    key = jax.random.PRNGKey(0)
    kx, ke = jax.random.split(key)
    x = jax.random.normal(kx, (2, embedding_dim, 16, 16), dtype=jnp.float32)
    # embedding.weight.data.uniform_(-1/K, 1/K)
    embedding = jax.random.uniform(
        ke, (num_embeddings, embedding_dim), dtype=jnp.float32,
        minval=-1.0 / num_embeddings, maxval=1.0 / num_embeddings)

    loss, quantized, perplexity, encodings = vector_quantizer(
        x, embedding, commitment_cost)
    jax.block_until_ready((loss, quantized, perplexity, encodings))

    # Validate against the pure-JAX reference.
    ref_loss, ref_q, ref_p, ref_e = _vq_reference(x, embedding, commitment_cost)
    assert jnp.allclose(loss, ref_loss, atol=1e-5), (loss, ref_loss)
    assert jnp.allclose(quantized, ref_q, atol=1e-5)
    assert jnp.allclose(perplexity, ref_p, atol=1e-5)
    assert jnp.allclose(encodings, ref_e)

    print("KERNEL_OK")
</pallas_src>

<mosaic_0001>
module attributes {stable_mosaic.version = 11 : i64} {
  func.func @_vq_kernel(%arg0: i32, %arg1: i32, %arg2: memref<1x4x256xf32, #tpu.memory_space<vmem>>, %arg3: memref<128x4xf32, #tpu.memory_space<vmem>>, %arg4: memref<128x1xf32, #tpu.memory_space<vmem>>, %arg5: memref<1x1x1x256xi32, #tpu.memory_space<vmem>>, %arg6: memref<1x1x1xf32, #tpu.memory_space<vmem>>) attributes {dimension_semantics = [#tpu.dimension_semantics<parallel>, #tpu.dimension_semantics<arbitrary>], iteration_bounds = array<i64: 2, 1>, scalar_prefetch = 0 : i64, scratch_operands = 0 : i64, tpu.core_type = #tpu.core_type<tc>, window_params = [{transform_indices = @transform_0, window_bounds = array<i64: 1, 4, 256>}, {pipeline_mode = #tpu.pipeline_mode<synchronous>, transform_indices = @transform_1, window_bounds = array<i64: 128, 4>}, {pipeline_mode = #tpu.pipeline_mode<synchronous>, transform_indices = @transform_2, window_bounds = array<i64: 128, 1>}, {transform_indices = @transform_3, window_bounds = array<i64: 1, 1, 1, 256>}, {transform_indices = @transform_4, window_bounds = array<i64: 1, 1, 1>}]} {
    %c0_i32 = arith.constant 0 : i32
    %0 = arith.cmpi eq, %arg1, %c0_i32 : i32
    %1 = arith.extui %0 : i1 to i32
    %c0_i32_0 = arith.constant 0 : i32
    %2 = arith.cmpi ne, %1, %c0_i32_0 : i32
    scf.if %2 {
      %cst_21 = arith.constant 0.000000e+00 : f32
      %34 = vector.broadcast %cst_21 : f32 to vector<1x1x1xf32>
      %c0_22 = arith.constant 0 : index
      %c0_23 = arith.constant 0 : index
      %c0_24 = arith.constant 0 : index
      %35 = vector.load %arg6[%c0_22, %c0_23, %c0_24] : memref<1x1x1xf32, #tpu.memory_space<vmem>>, vector<1x1x1xf32>
      tpu.vector_store %arg6[%c0_22, %c0_23, %c0_24], %34 {strides = array<i32>} : memref<1x1x1xf32, #tpu.memory_space<vmem>>, vector<1x1x1xf32>,
    } else {
    }
    %c0 = arith.constant 0 : index
    %c0_1 = arith.constant 0 : index
    %c0_2 = arith.constant 0 : index
    %3 = vector.load %arg2[%c0, %c0_1, %c0_2] : memref<1x4x256xf32, #tpu.memory_space<vmem>>, vector<1x4x256xf32>
    %4 = vector.shape_cast %3 : vector<1x4x256xf32> to vector<4x256xf32>
    %c0_3 = arith.constant 0 : index
    %c0_4 = arith.constant 0 : index
    %5 = vector.load %arg3[%c0_3, %c0_4] : memref<128x4xf32, #tpu.memory_space<vmem>>, vector<128x4xf32>
    %c0_5 = arith.constant 0 : index
    %c0_6 = arith.constant 0 : index
    %6 = vector.load %arg4[%c0_5, %c0_6] : memref<128x1xf32, #tpu.memory_space<vmem>>, vector<128x1xf32>
    %cst = arith.constant dense<0.000000e+00> : vector<128x256xf32>
    %7 = tpu.matmul %5, %4, %cst {dimension_numbers = #tpu.dot_dimension_numbers<[1], [0], [0], [1], [0, 0, 1, 1], [], []>} : vector<128x4xf32>, vector<4x256xf32>, vector<128x256xf32> -> vector<128x256xf32>
    %8 = vector.broadcast %6 : vector<128x1xf32> to vector<128x256xf32>
    %9 = arith.addf %8, %7 : vector<128x256xf32>
    %cst_7 = arith.constant dense<0x7F800000> : vector<256xf32>
    %10 = vector.multi_reduction <minimumf>, %9, %cst_7 [0] : vector<128x256xf32> to vector<256xf32>
    %11 = vector.shape_cast %10 : vector<256xf32> to vector<1x256xf32>
    %12 = tpu.iota {dimensions = array<i32: 0>} : vector<128x256xi32>
    %13 = vector.broadcast %11 : vector<1x256xf32> to vector<128x256xf32>
    %14 = arith.cmpf oeq, %9, %13 : vector<128x256xf32>
    %c128_i32 = arith.constant 128 : i32
    %15 = vector.broadcast %c128_i32 : i32 to vector<128x256xi32>
    %16 = arith.select %14, %12, %15 : vector<128x256xi1>, vector<128x256xi32>
    %cst_8 = arith.constant dense<2147483647> : vector<256xi32>
    %17 = vector.multi_reduction <minsi>, %16, %cst_8 [0] : vector<128x256xi32> to vector<256xi32>
    %18 = vector.shape_cast %17 : vector<256xi32> to vector<1x256xi32>
    %c0_9 = arith.constant 0 : index
    %c0_10 = arith.constant 0 : index
    %c0_11 = arith.constant 0 : index
    %c0_12 = arith.constant 0 : index
    %19 = vector.load %arg5[%c0_9, %c0_10, %c0_11, %c0_12] : memref<1x1x1x256xi32, #tpu.memory_space<vmem>>, vector<1x1x1x256xi32>
    %20 = vector.shape_cast %19 : vector<1x1x1x256xi32> to vector<1x256xi32>
    %21 = vector.shape_cast %18 : vector<1x256xi32> to vector<1x1x1x256xi32>
    tpu.vector_store %arg5[%c0_9, %c0_10, %c0_11, %c0_12], %21 {strides = array<i32>} : memref<1x1x1x256xi32, #tpu.memory_space<vmem>>, vector<1x1x1x256xi32>,
    %22 = arith.mulf %4, %4 : vector<4x256xf32>
    %cst_13 = arith.constant dense<0.000000e+00> : vector<256xf32>
    %23 = vector.multi_reduction <add>, %22, %cst_13 [0] : vector<4x256xf32> to vector<256xf32>
    %24 = vector.shape_cast %23 : vector<256xf32> to vector<1x256xf32>
    %25 = arith.addf %24, %11 : vector<1x256xf32>
    %c0_14 = arith.constant 0 : index
    %c0_15 = arith.constant 0 : index
    %c0_16 = arith.constant 0 : index
    %26 = vector.load %arg6[%c0_14, %c0_15, %c0_16] : memref<1x1x1xf32, #tpu.memory_space<vmem>>, vector<1x1x1xf32>
    %27 = vector.shape_cast %25 : vector<1x256xf32> to vector<1x1x256xf32>
    %cst_17 = arith.constant dense<0.000000e+00> : vector<1xf32>
    %28 = vector.multi_reduction <add>, %27, %cst_17 [1, 2] : vector<1x1x256xf32> to vector<1xf32>
    %29 = vector.shape_cast %28 : vector<1xf32> to vector<1x1x1xf32>
    %30 = vector.extract %29[0, 0, 0] : f32 from vector<1x1x1xf32>
    %31 = vector.broadcast %30 : f32 to vector<1x1x1xf32>
    %32 = arith.addf %26, %31 : vector<1x1x1xf32>
    %c0_18 = arith.constant 0 : index
    %c0_19 = arith.constant 0 : index
    %c0_20 = arith.constant 0 : index
    %33 = vector.load %arg6[%c0_18, %c0_19, %c0_20] : memref<1x1x1xf32, #tpu.memory_space<vmem>>, vector<1x1x1xf32>
    tpu.vector_store %arg6[%c0_18, %c0_19, %c0_20], %32 {strides = array<i32>} : memref<1x1x1xf32, #tpu.memory_space<vmem>>, vector<1x1x1xf32>,
    return
  }
  func.func @transform_0(%arg0: i32, %arg1: i32) -> (i32, i32, i32) {
    %c0_i32 = arith.constant 0 : i32
    %c0_i32_0 = arith.constant 0 : i32
    return %arg0, %c0_i32, %arg1 : i32, i32, i32
  }
  func.func @transform_1(%arg0: i32, %arg1: i32) -> (i32, i32) {
    %c0_i32 = arith.constant 0 : i32
    %c0_i32_0 = arith.constant 0 : i32
    %c0_i32_1 = arith.constant 0 : i32
    return %c0_i32, %c0_i32_0 : i32, i32
  }
  func.func @transform_2(%arg0: i32, %arg1: i32) -> (i32, i32) {
    %c0_i32 = arith.constant 0 : i32
    %c0_i32_0 = arith.constant 0 : i32
    %c0_i32_1 = arith.constant 0 : i32
    return %c0_i32, %c0_i32_0 : i32, i32
  }
  func.func @transform_3(%arg0: i32, %arg1: i32) -> (i32, i32, i32, i32) {
    %c0_i32 = arith.constant 0 : i32
    %c0_i32_0 = arith.constant 0 : i32
    %c0_i32_1 = arith.constant 0 : i32
    return %arg0, %arg1, %c0_i32, %c0_i32_0 : i32, i32, i32, i32
  }
  func.func @transform_4(%arg0: i32, %arg1: i32) -> (i32, i32, i32) {
    %c0_i32 = arith.constant 0 : i32
    %c0_i32_0 = arith.constant 0 : i32
    %c0_i32_1 = arith.constant 0 : i32
    return %arg0, %c0_i32, %c0_i32_0 : i32, i32, i32
  }
}

</mosaic_0001>

<llo_original>
// kernel: tpu_custom_call.1
$region0: #{tpu_custom_call.1}
  #allocation0 [shape = 'u32[]', space=smem, size = 0x4, offset = 0x4, fixed_abs, tag = 'smem constant byte address 0x4 - core index']
  #allocation1 [shape = 'u32[72,128]{1,0:T(1,128)}', space=vmem, size = 0x9000, scoped, tag = 'internal scratch']
  %s0 = inlined_call_operand.vmem [shape: f32[2,4,256], index: 0, kind: input, shape index: {}]
  %s1 = inlined_call_operand.vmem [shape: f32[128,4], index: 1, kind: input, shape index: {}]
  %s2 = inlined_call_operand.vmem [shape: f32[128,1], index: 2, kind: input, shape index: {}]
  %s3 = inlined_call_operand.hbm [shape: s32[2,1,1,256], index: 3, kind: output, shape index: {0}]
  %s4 = inlined_call_operand.vmem [shape: f32[2,1,1], index: 4, kind: output, shape index: {1}]
  %5 = xla_tuple %s3, %s4
  %s6 = sld [smem:[#allocation0]]
  $region57: #{tpu_custom_call.1} parent=0
    _
  %s8 = ssub.s32 1, %s6
  %s9 = scalar_select 0, %s8, %s6
  $region1: #{tpu_custom_call.1} parent=0
    #allocation2 [shape = 'u8[2048]{0}', space=vmem, size = 0x800, scoped, tag = 'output window, operand 0']
    #allocation3 [shape = 's32[2]{0}', space=sflag, size = 0x8, scoped, tag = 'scoped memory for tpu_custom_call.1']
    %10 = vsyncpa [#allocation3], 0
    %s11 = scalar_lea.sflag [#allocation3], 1
    %12 = vsyncpa %s11, 0
    loop: start=0, step=1, limit=4
    $region2: #{tpu_custom_call.1} parent=1 // loop_pre_header
      _
    $region3: #{tpu_custom_call.1} parent=1 // loop_header
      %s14 = sphi 0, %s18
      %p15 = scmp.ge.s32.totalorder %s14, 4
      %s21 = sphi 0, %s33
      %s22 = sphi 0, %s29
      %s23 = sphi 0, %s21
      %s24 = sphi 0, %s22
      %s25 = sphi 0, %s23
      %s26 = sphi 0, %s24
      %s38 = sphi 0, %s40
      %s41 = sphi 0, %s38
      %s42 = sphi 0, %s41
      %s58 = sphi 0, %s42
      %s62 = sphi 0, %s62
      %s64 = sphi 0, %s62
      %s65 = sphi 0, %s64
      %s79 = sphi 0, %s65
      %s83 = sphi 0, %s83
      %s85 = sphi 0, %s83
      %s86 = sphi 0, %s85
      %s100 = sphi 0, %s86
      %s108 = sphi 0, %s110
      %s111 = sphi 0, %s108
      %s112 = sphi 0, %s111
      %s128 = sphi 0, %s112
      %s134 = sphi 0, %s136
      %s137 = sphi 0, %s134
      %s138 = sphi 0, %s137
      %s154 = sphi 0, %s138
    $region4: #{tpu_custom_call.1} parent=1 // loop_header_branch
      %17 = sbr.rel (%p15) target = $region8
    $region5: #{tpu_custom_call.1} parent=1 // loop_body
      %s19 = ssub.s32 %s14, 1
      %s20 = ssub.s32 %s14, 2
      %s27 = sadd.s32 1, %s22
      %p28 = scmp.ge.s32.totalorder %s27, 1
      %s29 = scalar_select %p28, 0, %s27
      %s30 = sadd.s32 1, %s21
      %s31 = scalar_select %p28, %s30, %s21
      %p32 = scmp.ge.s32.totalorder %s31, 2
      %s33 = scalar_select %p32, 0, %s31
      %s34 = ssub.s32 %s21, %s33
      %s35 = ssub.s32 %s22, %s29
      %s36 = sor.u32 %s34, %s35
      %p37 = scmp.eq.s32.totalorder %s36, 0
      %s39 = sadd.s32 %s38, 1
      %s40 = scalar_select %p37, %s38, %s39
      %p43 = pneg %p37
      %p44 = scmp.eq.s32.totalorder %s14, 1
      %p45 = por %p43, %p44
      %p46 = scmp.ne.s32.totalorder %s38, %s41
      %p47 = scmp.eq.s32.totalorder %s14, 0
      %p48 = por %p46, %p47
      %p49 = scmp.ne.s32.totalorder %s38, %s41
      %p50 = scmp.eq.s32.totalorder %s19, 1
      %p51 = por %p49, %p50
      %p52 = scmp.ne.s32.totalorder %s41, %s42
      %p53 = scmp.eq.s32.totalorder %s19, 0
      %p54 = por %p52, %p53
      %p55 = scmp.ne.s32.totalorder %s41, %s42
      %p56 = scmp.eq.s32.totalorder %s20, 1
      %p57 = por %p55, %p56
      %p59 = scmp.ne.s32.totalorder %s42, %s58
      %p60 = scmp.eq.s32.totalorder %s20, 0
      %p61 = por %p59, %p60
      %s63 = sadd.s32 %s62, 1
      %p66 = scmp.eq.s32.totalorder %s14, 1
      %p67 = scmp.ne.s32.totalorder %s62, %s64
      %p68 = scmp.eq.s32.totalorder %s14, 0
      %p69 = por %p67, %p68
      %p70 = scmp.ne.s32.totalorder %s62, %s64
      %p71 = scmp.eq.s32.totalorder %s19, 1
      %p72 = por %p70, %p71
      %p73 = scmp.ne.s32.totalorder %s64, %s65
      %p74 = scmp.eq.s32.totalorder %s19, 0
      %p75 = por %p73, %p74
      %p76 = scmp.ne.s32.totalorder %s64, %s65
      %p77 = scmp.eq.s32.totalorder %s20, 1
      %p78 = por %p76, %p77
      %p80 = scmp.ne.s32.totalorder %s65, %s79
      %p81 = scmp.eq.s32.totalorder %s20, 0
      %p82 = por %p80, %p81
      %s84 = sadd.s32 %s83, 1
      %p87 = scmp.eq.s32.totalorder %s14, 1
      %p88 = scmp.ne.s32.totalorder %s83, %s85
      %p89 = scmp.eq.s32.totalorder %s14, 0
      %p90 = por %p88, %p89
      %p91 = scmp.ne.s32.totalorder %s83, %s85
      %p92 = scmp.eq.s32.totalorder %s19, 1
      %p93 = por %p91, %p92
      %p94 = scmp.ne.s32.totalorder %s85, %s86
      %p95 = scmp.eq.s32.totalorder %s19, 0
      %p96 = por %p94, %p95
      %p97 = scmp.ne.s32.totalorder %s85, %s86
      %p98 = scmp.eq.s32.totalorder %s20, 1
      %p99 = por %p97, %p98
      %p101 = scmp.ne.s32.totalorder %s86, %s100
      %p102 = scmp.eq.s32.totalorder %s20, 0
      %p103 = por %p101, %p102
      %s104 = ssub.s32 %s21, %s33
      %s105 = ssub.s32 %s22, %s29
      %s106 = sor.u32 %s104, %s105
      %p107 = scmp.eq.s32.totalorder %s106, 0
      %s109 = sadd.s32 %s108, 1
      %s110 = scalar_select %p107, %s108, %s109
      %p113 = pneg %p107
      %p114 = scmp.eq.s32.totalorder %s14, 1
      %p115 = por %p113, %p114
      %p116 = scmp.ne.s32.totalorder %s108, %s111
      %p117 = scmp.eq.s32.totalorder %s14, 0
      %p118 = por %p116, %p117
      %p119 = scmp.ne.s32.totalorder %s108, %s111
      %p120 = scmp.eq.s32.totalorder %s19, 1
      %p121 = por %p119, %p120
      %p122 = scmp.ne.s32.totalorder %s111, %s112
      %p123 = scmp.eq.s32.totalorder %s19, 0
      %p124 = por %p122, %p123
      %p125 = scmp.ne.s32.totalorder %s111, %s112
      %p126 = scmp.eq.s32.totalorder %s20, 1
      %p127 = por %p125, %p126
      %p129 = scmp.ne.s32.totalorder %s112, %s128
      %p130 = scmp.eq.s32.totalorder %s20, 0
      %p131 = por %p129, %p130
      %s132 = ssub.s32 %s21, %s33
      %p133 = scmp.eq.s32.totalorder %s132, 0
      %s135 = sadd.s32 %s134, 1
      %s136 = scalar_select %p133, %s134, %s135
      %p139 = pneg %p133
      %p140 = scmp.eq.s32.totalorder %s14, 1
      %p141 = por %p139, %p140
      %p142 = scmp.ne.s32.totalorder %s134, %s137
      %p143 = scmp.eq.s32.totalorder %s14, 0
      %p144 = por %p142, %p143
      %p145 = scmp.ne.s32.totalorder %s134, %s137
      %p146 = scmp.eq.s32.totalorder %s19, 1
      %p147 = por %p145, %p146
      %p148 = scmp.ne.s32.totalorder %s137, %s138
      %p149 = scmp.eq.s32.totalorder %s19, 0
      %p150 = por %p148, %p149
      %p151 = scmp.ne.s32.totalorder %s137, %s138
      %p152 = scmp.eq.s32.totalorder %s20, 1
      %p153 = por %p151, %p152
      %p155 = scmp.ne.s32.totalorder %s138, %s154
      %p156 = scmp.eq.s32.totalorder %s20, 0
      %p157 = por %p155, %p156
      %p158 = scmp.le.s32.totalorder 1, %s14
      %p159 = scmp.lt.s32.totalorder %s14, 3
      %p160 = pnand %p158, %p159
      %p161 = pneg %p160
      // Predicated region
      $region9: #{tpu_custom_call.1} parent=5 // pred_check
        _
      $region10: #{tpu_custom_call.1} parent=5 // pred_check_branch
        %163 = sbr.rel (%p160) target = $region12
      $region11: #{tpu_custom_call.1} parent=5 // pred_region
        %s164 = ssub.s32 %s14, 1
        // Predicated region
        $region13: #{tpu_custom_call.1} parent=11 // pred_check
          %p165 = pneg %p75
        $region14: #{tpu_custom_call.1} parent=11 // pred_check_branch
          %167 = sbr.rel (%p165) target = $region16
        $region15: #{tpu_custom_call.1} parent=11 // pred_region
          _
        $region16: #{tpu_custom_call.1} parent=11 // pred_fallthru
          _
        // Predicated region
        $region17: #{tpu_custom_call.1} parent=11 // pred_check
          %p168 = pneg %p96
        $region18: #{tpu_custom_call.1} parent=11 // pred_check_branch
          %170 = sbr.rel (%p168) target = $region20
        $region19: #{tpu_custom_call.1} parent=11 // pred_region
          _
        $region20: #{tpu_custom_call.1} parent=11 // pred_fallthru
          _
      $region12: #{tpu_custom_call.1} parent=5 // pred_fallthru
        _
      %p171 = scmp.lt.s32.totalorder %s14, 2
      // Predicated region
      $region21: #{tpu_custom_call.1} parent=5 // pred_check
        %p172 = pneg %p171
      $region22: #{tpu_custom_call.1} parent=5 // pred_check_branch
        %174 = sbr.rel (%p172) target = $region24
      $region23: #{tpu_custom_call.1} parent=5 // pred_region
        // Predicated region
        $region25: #{tpu_custom_call.1} parent=23 // pred_check
          %p175 = pneg %p48
        $region26: #{tpu_custom_call.1} parent=23 // pred_check_branch
          %177 = sbr.rel (%p175) target = $region28
        $region27: #{tpu_custom_call.1} parent=23 // pred_region
          %s178 = smul.u32 2, %s22
          %p179 = scmp.lt.s32.totalorder %s21, 1
          %s180 = scalar_select %p179, %s21, 1
          %p181 = scmp.lt.s32.totalorder %s178, 1
          %s182 = scalar_select %p181, %s178, 1
          %s183 = smul.addr %s180, 2
          %s184 = sadd.s32 %s182, %s183
          %s185 = smul.addr %s184, 4
          %s186 = scalar_lea.vmem %s0, %s185
          %s187 = smul.u32 2, %s22
        $region28: #{tpu_custom_call.1} parent=23 // pred_fallthru
          _
      $region24: #{tpu_custom_call.1} parent=5 // pred_fallthru
        _
      %p188 = scmp.le.s32.totalorder 1, %s14
      %p189 = scmp.lt.s32.totalorder %s14, 3
      %p190 = pnand %p188, %p189
      %p191 = pneg %p190
      // Predicated region
      $region29: #{tpu_custom_call.1} parent=5 // pred_check
        _
      $region30: #{tpu_custom_call.1} parent=5 // pred_check_branch
        %193 = sbr.rel (%p190) target = $region32
      $region31: #{tpu_custom_call.1} parent=5 // pred_region
        %s194 = ssub.s32 %s14, 1
        %s195 = smul.u32 2, %s24
        %p196 = scmp.lt.s32.totalorder %s23, 1
        %s197 = scalar_select %p196, %s23, 1
        %p198 = scmp.lt.s32.totalorder %s195, 1
        %s199 = scalar_select %p198, %s195, 1
        %s200 = smul.addr %s197, 2
        %s201 = sadd.s32 %s199, %s200
        %s202 = smul.addr %s201, 4
        %s203 = scalar_lea.vmem %s0, %s202
        %p204 = pneg %p54
        %p205 = pneg %p51
        %p206 = pneg %p75
        %p207 = pneg %p72
        %p208 = pneg %p96
        %p209 = pneg %p93
        %p210 = pneg %p124
        %p211 = pneg %p121
        %s212 = sand.u32 %s111, 1
        %s213 = scalar_lea.sflag [#allocation3], %s212
        %s214 = sand.u32 %s111, 1
        %s215 = smul.addr %s214, 2
        %s216 = scalar_lea.vmem [#allocation2], %s215
        %p217 = pneg %p150
        %p218 = pneg %p147
        %p219 = scmp.lt.s32.totalorder %s23, 1
        %s220 = scalar_select %p219, %s23, 1
        %s221 = scalar_lea.vmem %s4, %s220
        %s222 = smul.u32 2, %s24
        %p223 = scmp.lt.s32.totalorder %s23, 1
        %s224 = scalar_select %p223, %s23, 1
        %p225 = scmp.lt.s32.totalorder %s222, 1
        %s226 = scalar_select %p225, %s222, 1
        %s227 = smul.addr %s224, 2
        %s228 = sadd.s32 %s226, %s227
        %s229 = smul.addr %s228, 4
        %s230 = scalar_lea.vmem %s0, %s229
        %s231 = smul.u32 2, %s24
        %p232 = scmp.lt.s32.totalorder %s23, 1
        %s233 = scalar_select %p232, %s23, 1
        %s234 = scalar_lea.vmem %s4, %s233
        %p235 = scmp.eq.s32.totalorder %s24, 0
        // Predicated region
        $region33: #{tpu_custom_call.1} parent=31 // pred_check
          %p236 = pneg %p235
        $region34: #{tpu_custom_call.1} parent=31 // pred_check_branch
          %238 = sbr.rel (%p236) target = $region36
        $region35: #{tpu_custom_call.1} parent=31 // pred_region
          %vm239 = vcmask 0
          %240 = vst.msk [vmem:[%s234] sm:$0x1] %vm239, 0.0
        $region36: #{tpu_custom_call.1} parent=31 // pred_fallthru
          _
        %v241 = vld [vmem:[%s230] sm:$0xff]
        %v242 = vld [vmem:[%s1] sm:$0xff]
        %v243 = vld [vmem:[%s1 + $0x8] sm:$0xff]
        %v244 = vld [vmem:[%s1 + $0x10] sm:$0xff]
        %v245 = vld [vmem:[%s1 + $0x18] sm:$0xff]
        %v246 = vld [vmem:[%s1 + $0x20] sm:$0xff]
        %v247 = vld [vmem:[%s1 + $0x28] sm:$0xff]
        %v248 = vld [vmem:[%s1 + $0x30] sm:$0xff]
        %v249 = vld [vmem:[%s1 + $0x38] sm:$0xff]
        %v250 = vld [vmem:[%s1 + $0x40] sm:$0xff]
        %v251 = vld [vmem:[%s1 + $0x48] sm:$0xff]
        %v252 = vld [vmem:[%s1 + $0x50] sm:$0xff]
        %v253 = vld [vmem:[%s1 + $0x58] sm:$0xff]
        %v254 = vld [vmem:[%s1 + $0x60] sm:$0xff]
        %v255 = vld [vmem:[%s1 + $0x68] sm:$0xff]
        %v256 = vld [vmem:[%s1 + $0x70] sm:$0xff]
        %v257 = vld [vmem:[%s1 + $0x78] sm:$0xff]
        %v258 = vld [vmem:[%s2] sm:$0xff]
        %v259 = vld [vmem:[%s2 + $0x8] sm:$0xff]
        %v260 = vld [vmem:[%s2 + $0x10] sm:$0xff]
        %v261 = vld [vmem:[%s2 + $0x18] sm:$0xff]
        %v262 = vld [vmem:[%s2 + $0x20] sm:$0xff]
        %v263 = vld [vmem:[%s2 + $0x28] sm:$0xff]
        %v264 = vld [vmem:[%s2 + $0x30] sm:$0xff]
        %v265 = vld [vmem:[%s2 + $0x38] sm:$0xff]
        %v266 = vld [vmem:[%s2 + $0x40] sm:$0xff]
        %v267 = vld [vmem:[%s2 + $0x48] sm:$0xff]
        %v268 = vld [vmem:[%s2 + $0x50] sm:$0xff]
        %v269 = vld [vmem:[%s2 + $0x58] sm:$0xff]
        %v270 = vld [vmem:[%s2 + $0x60] sm:$0xff]
        %v271 = vld [vmem:[%s2 + $0x68] sm:$0xff]
        %v272 = vld [vmem:[%s2 + $0x70] sm:$0xff]
        %v273 = vld [vmem:[%s2 + $0x78] sm:$0xff]
        %275 = vst [vmem:[#allocation1] ss:$2 sm:$0xff] %v241
        %v276 = vld.sshfl [vmem:[#allocation1] sm:$0xff pattern:$0x75316420]
        %v277 = vld.sshfl [vmem:[#allocation1 + $0x8] sm:$0xff pattern:$0x75316420]
        %vm278 = vcmask 31744
        %v280 = vsel %vm278, %v242, 0
        %v283 = vsel %vm278, %v243, 0
        %v286 = vsel %vm278, %v244, 0
        %v289 = vsel %vm278, %v245, 0
        %v292 = vsel %vm278, %v246, 0
        %v295 = vsel %vm278, %v247, 0
        %v298 = vsel %vm278, %v248, 0
        %v301 = vsel %vm278, %v249, 0
        %v304 = vsel %vm278, %v250, 0
        %v307 = vsel %vm278, %v251, 0
        %v310 = vsel %vm278, %v252, 0
        %v313 = vsel %vm278, %v253, 0
        %v316 = vsel %vm278, %v254, 0
        %v319 = vsel %vm278, %v255, 0
        %v322 = vsel %vm278, %v256, 0
        %v325 = vsel %vm278, %v257, 0
        %vm327 = vcmask 1043456
        %v328 = vsel %vm327, %v276, 0
        %v330 = vsel %vm327, %v277, 0
        %332 = vmatpush.msra.mxu0 0.0
        %333 = vmatpush.msra.mxu0 0.0
        %334 = vmatpush.msra.mxu0 0.0
        %335 = vmatpush.msra.mxu0 0.0
        %336 = vmatpush.msra.mxu0 0.0
        %337 = vmatpush.msra.mxu0 0.0
        %338 = vmatpush.msra.mxu0 0.0
        %339 = vmatpush.msra.mxu0 0.0
        %340 = vmatpush.msra.mxu0 0.0
        %341 = vmatpush.msra.mxu0 0.0
        %342 = vmatpush.msra.mxu0 0.0
        %343 = vmatpush.msra.mxu0 0.0
        %344 = vmatpush.msra.mxu0 0.0
        %345 = vmatpush.msra.mxu0 0.0
        %346 = vmatpush.msra.mxu0 0.0
        %347 = vmatpush.msra.mxu0 %v328
        %348 = vmatmul.f32.gmra.mxu0 %v280
        %v349 = vpop.f32.mrf.mxu0
        %v350 = vadd.f32 0.0, %v349
        %351 = vmatmul.f32.gmra.mxu0 %v283
        %v352 = vpop.f32.mrf.mxu0
        %v353 = vadd.f32 0.0, %v352
        %354 = vmatmul.f32.gmra.mxu0 %v286
        %v355 = vpop.f32.mrf.mxu0
        %v356 = vadd.f32 0.0, %v355
        %357 = vmatmul.f32.gmra.mxu0 %v289
        %v358 = vpop.f32.mrf.mxu0
        %v359 = vadd.f32 0.0, %v358
        %360 = vmatmul.f32.gmra.mxu0 %v292
        %v361 = vpop.f32.mrf.mxu0
        %v362 = vadd.f32 0.0, %v361
        %363 = vmatmul.f32.gmra.mxu0 %v295
        %v364 = vpop.f32.mrf.mxu0
        %v365 = vadd.f32 0.0, %v364
        %366 = vmatmul.f32.gmra.mxu0 %v298
        %v367 = vpop.f32.mrf.mxu0
        %v368 = vadd.f32 0.0, %v367
        %369 = vmatmul.f32.gmra.mxu0 %v301
        %v370 = vpop.f32.mrf.mxu0
        %v371 = vadd.f32 0.0, %v370
        %372 = vmatmul.f32.gmra.mxu0 %v304
        %v373 = vpop.f32.mrf.mxu0
        %v374 = vadd.f32 0.0, %v373
        %375 = vmatmul.f32.gmra.mxu0 %v307
        %v376 = vpop.f32.mrf.mxu0
        %v377 = vadd.f32 0.0, %v376
        %378 = vmatmul.f32.gmra.mxu0 %v310
        %v379 = vpop.f32.mrf.mxu0
        %v380 = vadd.f32 0.0, %v379
        %381 = vmatmul.f32.gmra.mxu0 %v313
        %v382 = vpop.f32.mrf.mxu0
        %v383 = vadd.f32 0.0, %v382
        %384 = vmatmul.f32.gmra.mxu0 %v316
        %v385 = vpop.f32.mrf.mxu0
        %v386 = vadd.f32 0.0, %v385
        %387 = vmatmul.f32.gmra.mxu0 %v319
        %v388 = vpop.f32.mrf.mxu0
        %v389 = vadd.f32 0.0, %v388
        %390 = vmatmul.f32.gmra.mxu0 %v322
        %v391 = vpop.f32.mrf.mxu0
        %v392 = vadd.f32 0.0, %v391
        %393 = vmatmul.f32.gmra.mxu0 %v325
        %v394 = vpop.f32.mrf.mxu0
        %v395 = vadd.f32 0.0, %v394
        %396 = vdwg.mxu0
        %397 = vmatpush.msra.mxu0 0.0
        %398 = vmatpush.msra.mxu0 0.0
        %399 = vmatpush.msra.mxu0 0.0
        %400 = vmatpush.msra.mxu0 0.0
        %401 = vmatpush.msra.mxu0 0.0
        %402 = vmatpush.msra.mxu0 0.0
        %403 = vmatpush.msra.mxu0 0.0
        %404 = vmatpush.msra.mxu0 0.0
        %405 = vmatpush.msra.mxu0 0.0
        %406 = vmatpush.msra.mxu0 0.0
        %407 = vmatpush.msra.mxu0 0.0
        %408 = vmatpush.msra.mxu0 0.0
        %409 = vmatpush.msra.mxu0 0.0
        %410 = vmatpush.msra.mxu0 0.0
        %411 = vmatpush.msra.mxu0 0.0
        %412 = vmatpush.msra.mxu0 %v330
        %413 = vmatmul.f32.gmra.mxu0 %v280
        %v414 = vpop.f32.mrf.mxu0
        %v415 = vadd.f32 0.0, %v414
        %416 = vmatmul.f32.gmra.mxu0 %v283
        %v417 = vpop.f32.mrf.mxu0
        %v418 = vadd.f32 0.0, %v417
        %419 = vmatmul.f32.gmra.mxu0 %v286
        %v420 = vpop.f32.mrf.mxu0
        %v421 = vadd.f32 0.0, %v420
        %422 = vmatmul.f32.gmra.mxu0 %v289
        %v423 = vpop.f32.mrf.mxu0
        %v424 = vadd.f32 0.0, %v423
        %425 = vmatmul.f32.gmra.mxu0 %v292
        %v426 = vpop.f32.mrf.mxu0
        %v427 = vadd.f32 0.0, %v426
        %428 = vmatmul.f32.gmra.mxu0 %v295
        %v429 = vpop.f32.mrf.mxu0
        %v430 = vadd.f32 0.0, %v429
        %431 = vmatmul.f32.gmra.mxu0 %v298
        %v432 = vpop.f32.mrf.mxu0
        %v433 = vadd.f32 0.0, %v432
        %434 = vmatmul.f32.gmra.mxu0 %v301
        %v435 = vpop.f32.mrf.mxu0
        %v436 = vadd.f32 0.0, %v435
        %437 = vmatmul.f32.gmra.mxu0 %v304
        %v438 = vpop.f32.mrf.mxu0
        %v439 = vadd.f32 0.0, %v438
        %440 = vmatmul.f32.gmra.mxu0 %v307
        %v441 = vpop.f32.mrf.mxu0
        %v442 = vadd.f32 0.0, %v441
        %443 = vmatmul.f32.gmra.mxu0 %v310
        %v444 = vpop.f32.mrf.mxu0
        %v445 = vadd.f32 0.0, %v444
        %446 = vmatmul.f32.gmra.mxu0 %v313
        %v447 = vpop.f32.mrf.mxu0
        %v448 = vadd.f32 0.0, %v447
        %449 = vmatmul.f32.gmra.mxu0 %v316
        %v450 = vpop.f32.mrf.mxu0
        %v451 = vadd.f32 0.0, %v450
        %452 = vmatmul.f32.gmra.mxu0 %v319
        %v453 = vpop.f32.mrf.mxu0
        %v454 = vadd.f32 0.0, %v453
        %455 = vmatmul.f32.gmra.mxu0 %v322
        %v456 = vpop.f32.mrf.mxu0
        %v457 = vadd.f32 0.0, %v456
        %458 = vmatmul.f32.gmra.mxu0 %v325
        %v459 = vpop.f32.mrf.mxu0
        %v460 = vadd.f32 0.0, %v459
        %461 = vdwg.mxu0
        %463 = vset.pattern.permute.xlu0 0
        %464 = vperm.xlu0 %463, %v258
        %v465 = vpop.permute.xlu0 %464
        %468 = vset.pattern.permute.xlu0 0
        %469 = vperm.xlu0 %468, %v259
        %v470 = vpop.permute.xlu0 %469
        %473 = vset.pattern.permute.xlu0 0
        %474 = vperm.xlu0 %473, %v260
        %v475 = vpop.permute.xlu0 %474
        %478 = vset.pattern.permute.xlu0 0
        %479 = vperm.xlu0 %478, %v261
        %v480 = vpop.permute.xlu0 %479
        %483 = vset.pattern.permute.xlu0 0
        %484 = vperm.xlu0 %483, %v262
        %v485 = vpop.permute.xlu0 %484
        %488 = vset.pattern.permute.xlu0 0
        %489 = vperm.xlu0 %488, %v263
        %v490 = vpop.permute.xlu0 %489
        %493 = vset.pattern.permute.xlu0 0
        %494 = vperm.xlu0 %493, %v264
        %v495 = vpop.permute.xlu0 %494
        %498 = vset.pattern.permute.xlu0 0
        %499 = vperm.xlu0 %498, %v265
        %v500 = vpop.permute.xlu0 %499
        %503 = vset.pattern.permute.xlu0 0
        %504 = vperm.xlu0 %503, %v266
        %v505 = vpop.permute.xlu0 %504
        %508 = vset.pattern.permute.xlu0 0
        %509 = vperm.xlu0 %508, %v267
        %v510 = vpop.permute.xlu0 %509
        %513 = vset.pattern.permute.xlu0 0
        %514 = vperm.xlu0 %513, %v268
        %v515 = vpop.permute.xlu0 %514
        %518 = vset.pattern.permute.xlu0 0
        %519 = vperm.xlu0 %518, %v269
        %v520 = vpop.permute.xlu0 %519
        %523 = vset.pattern.permute.xlu0 0
        %524 = vperm.xlu0 %523, %v270
        %v525 = vpop.permute.xlu0 %524
        %528 = vset.pattern.permute.xlu0 0
        %529 = vperm.xlu0 %528, %v271
        %v530 = vpop.permute.xlu0 %529
        %533 = vset.pattern.permute.xlu0 0
        %534 = vperm.xlu0 %533, %v272
        %v535 = vpop.permute.xlu0 %534
        %538 = vset.pattern.permute.xlu0 0
        %539 = vperm.xlu0 %538, %v273
        %v540 = vpop.permute.xlu0 %539
        %v542 = vadd.f32 %v465, %v350
        %v543 = vadd.f32 %v465, %v415
        %v544 = vadd.f32 %v470, %v353
        %v545 = vadd.f32 %v470, %v418
        %v546 = vadd.f32 %v475, %v356
        %v547 = vadd.f32 %v475, %v421
        %v548 = vadd.f32 %v480, %v359
        %v549 = vadd.f32 %v480, %v424
        %v550 = vadd.f32 %v485, %v362
        %v551 = vadd.f32 %v485, %v427
        %v552 = vadd.f32 %v490, %v365
        %v553 = vadd.f32 %v490, %v430
        %v554 = vadd.f32 %v495, %v368
        %v555 = vadd.f32 %v495, %v433
        %v556 = vadd.f32 %v500, %v371
        %v557 = vadd.f32 %v500, %v436
        %v558 = vadd.f32 %v505, %v374
        %v559 = vadd.f32 %v505, %v439
        %v560 = vadd.f32 %v510, %v377
        %v561 = vadd.f32 %v510, %v442
        %v562 = vadd.f32 %v515, %v380
        %v563 = vadd.f32 %v515, %v445
        %v564 = vadd.f32 %v520, %v383
        %v565 = vadd.f32 %v520, %v448
        %v566 = vadd.f32 %v525, %v386
        %v567 = vadd.f32 %v525, %v451
        %v568 = vadd.f32 %v530, %v389
        %v569 = vadd.f32 %v530, %v454
        %v570 = vadd.f32 %v535, %v392
        %v571 = vadd.f32 %v535, %v457
        %v572 = vadd.f32 %v540, %v395
        %v573 = vadd.f32 %v540, %v460
        %v574 = vmin.f32 %v542, %v546
        %v575 = vmin.f32 %v544, %v548
        %v576 = vmin.f32 %v574, %v550
        %v577 = vmin.f32 %v575, %v552
        %v578 = vmin.f32 %v576, %v554
        %v579 = vmin.f32 %v577, %v556
        %v580 = vmin.f32 %v578, %v558
        %v581 = vmin.f32 %v579, %v560
        %v582 = vmin.f32 %v580, %v562
        %v583 = vmin.f32 %v581, %v564
        %v584 = vmin.f32 %v582, %v566
        %v585 = vmin.f32 %v583, %v568
        %v586 = vmin.f32 %v584, %v570
        %v587 = vmin.f32 %v585, %v572
        %v588 = vmin.f32 %v586, %v587
        %v589 = vrot.slane %v588, 4
        %v590 = vmin.f32 %v588, %v589
        %v591 = vrot.slane %v590, 2
        %v592 = vmin.f32 %v590, %v591
        %v593 = vrot.slane %v592, 1
        %v594 = vmin.f32 %v592, %v593
        %v595 = vmin.f32 %v543, %v547
        %v596 = vmin.f32 %v545, %v549
        %v597 = vmin.f32 %v595, %v551
        %v598 = vmin.f32 %v596, %v553
        %v599 = vmin.f32 %v597, %v555
        %v600 = vmin.f32 %v598, %v557
        %v601 = vmin.f32 %v599, %v559
        %v602 = vmin.f32 %v600, %v561
        %v603 = vmin.f32 %v601, %v563
        %v604 = vmin.f32 %v602, %v565
        %v605 = vmin.f32 %v603, %v567
        %v606 = vmin.f32 %v604, %v569
        %v607 = vmin.f32 %v605, %v571
        %v608 = vmin.f32 %v606, %v573
        %v609 = vmin.f32 %v607, %v608
        %v610 = vrot.slane %v609, 4
        %v611 = vmin.f32 %v609, %v610
        %v612 = vrot.slane %v611, 2
        %v613 = vmin.f32 %v611, %v612
        %v614 = vrot.slane %v613, 1
        %v615 = vmin.f32 %v613, %v614
        %v616 = vlaneseq
        %v617 = vshrl.u32 %v616, 7
        %v618 = vadd.s32 %v617, 8
        %v619 = vadd.s32 %v617, 16
        %v620 = vadd.s32 %v617, 24
        %v621 = vadd.s32 %v617, 32
        %v622 = vadd.s32 %v617, 40
        %v623 = vadd.s32 %v617, 48
        %v624 = vadd.s32 %v617, 56
        %v625 = vadd.s32 %v617, 64
        %v626 = vadd.s32 %v617, 72
        %v627 = vadd.s32 %v617, 80
        %v628 = vadd.s32 %v617, 88
        %v629 = vadd.s32 %v617, 96
        %v630 = vadd.s32 %v617, 104
        %v631 = vadd.s32 %v617, 112
        %v632 = vadd.s32 %v617, 120
        %vm633 = vcmp.eq.f32.partialorder %v542, %v594
        %vm634 = vcmp.eq.f32.partialorder %v543, %v615
        %vm635 = vcmp.eq.f32.partialorder %v544, %v594
        %vm636 = vcmp.eq.f32.partialorder %v545, %v615
        %vm637 = vcmp.eq.f32.partialorder %v546, %v594
        %vm638 = vcmp.eq.f32.partialorder %v547, %v615
        %vm639 = vcmp.eq.f32.partialorder %v548, %v594
        %vm640 = vcmp.eq.f32.partialorder %v549, %v615
        %vm641 = vcmp.eq.f32.partialorder %v550, %v594
        %vm642 = vcmp.eq.f32.partialorder %v551, %v615
        %vm643 = vcmp.eq.f32.partialorder %v552, %v594
        %vm644 = vcmp.eq.f32.partialorder %v553, %v615
        %vm645 = vcmp.eq.f32.partialorder %v554, %v594
        %vm646 = vcmp.eq.f32.partialorder %v555, %v615
        %vm647 = vcmp.eq.f32.partialorder %v556, %v594
        %vm648 = vcmp.eq.f32.partialorder %v557, %v615
        %vm649 = vcmp.eq.f32.partialorder %v558, %v594
        %vm650 = vcmp.eq.f32.partialorder %v559, %v615
        %vm651 = vcmp.eq.f32.partialorder %v560, %v594
        %vm652 = vcmp.eq.f32.partialorder %v561, %v615
        %vm653 = vcmp.eq.f32.partialorder %v562, %v594
        %vm654 = vcmp.eq.f32.partialorder %v563, %v615
        %vm655 = vcmp.eq.f32.partialorder %v564, %v594
        %vm656 = vcmp.eq.f32.partialorder %v565, %v615
        %vm657 = vcmp.eq.f32.partialorder %v566, %v594
        %vm658 = vcmp.eq.f32.partialorder %v567, %v615
        %vm659 = vcmp.eq.f32.partialorder %v568, %v594
        %vm660 = vcmp.eq.f32.partialorder %v569, %v615
        %vm661 = vcmp.eq.f32.partialorder %v570, %v594
        %vm662 = vcmp.eq.f32.partialorder %v571, %v615
        %vm663 = vcmp.eq.f32.partialorder %v572, %v594
        %vm664 = vcmp.eq.f32.partialorder %v573, %v615
        %v665 = vsel %vm633, %v617, 128
        %v666 = vsel %vm634, %v617, 128
        %v667 = vsel %vm635, %v618, 128
        %v668 = vsel %vm636, %v618, 128
        %v669 = vsel %vm637, %v619, 128
        %v670 = vsel %vm638, %v619, 128
        %v671 = vsel %vm639, %v620, 128
        %v672 = vsel %vm640, %v620, 128
        %v673 = vsel %vm641, %v621, 128
        %v674 = vsel %vm642, %v621, 128
        %v675 = vsel %vm643, %v622, 128
        %v676 = vsel %vm644, %v622, 128
        %v677 = vsel %vm645, %v623, 128
        %v678 = vsel %vm646, %v623, 128
        %v679 = vsel %vm647, %v624, 128
        %v680 = vsel %vm648, %v624, 128
        %v681 = vsel %vm649, %v625, 128
        %v682 = vsel %vm650, %v625, 128
        %v683 = vsel %vm651, %v626, 128
        %v684 = vsel %vm652, %v626, 128
        %v685 = vsel %vm653, %v627, 128
        %v686 = vsel %vm654, %v627, 128
        %v687 = vsel %vm655, %v628, 128
        %v688 = vsel %vm656, %v628, 128
        %v689 = vsel %vm657, %v629, 128
        %v690 = vsel %vm658, %v629, 128
        %v691 = vsel %vm659, %v630, 128
        %v692 = vsel %vm660, %v630, 128
        %v693 = vsel %vm661, %v631, 128
        %v694 = vsel %vm662, %v631, 128
        %v695 = vsel %vm663, %v632, 128
        %v696 = vsel %vm664, %v632, 128
        %vm697 = vcmp.lt.s32.totalorder %v665, %v669
        %v698 = vsel %vm697, %v665, %v669
        %vm699 = vcmp.lt.s32.totalorder %v667, %v671
        %v700 = vsel %vm699, %v667, %v671
        %vm701 = vcmp.lt.s32.totalorder %v698, %v673
        %v702 = vsel %vm701, %v698, %v673
        %vm703 = vcmp.lt.s32.totalorder %v700, %v675
        %v704 = vsel %vm703, %v700, %v675
        %vm705 = vcmp.lt.s32.totalorder %v702, %v677
        %v706 = vsel %vm705, %v702, %v677
        %vm707 = vcmp.lt.s32.totalorder %v704, %v679
        %v708 = vsel %vm707, %v704, %v679
        %vm709 = vcmp.lt.s32.totalorder %v706, %v681
        %v710 = vsel %vm709, %v706, %v681
        %vm711 = vcmp.lt.s32.totalorder %v708, %v683
        %v712 = vsel %vm711, %v708, %v683
        %vm713 = vcmp.lt.s32.totalorder %v710, %v685
        %v714 = vsel %vm713, %v710, %v685
        %vm715 = vcmp.lt.s32.totalorder %v712, %v687
        %v716 = vsel %vm715, %v712, %v687
        %vm717 = vcmp.lt.s32.totalorder %v714, %v689
        %v718 = vsel %vm717, %v714, %v689
        %vm719 = vcmp.lt.s32.totalorder %v716, %v691
        %v720 = vsel %vm719, %v716, %v691
        %vm721 = vcmp.lt.s32.totalorder %v718, %v693
        %v722 = vsel %vm721, %v718, %v693
        %vm723 = vcmp.lt.s32.totalorder %v720, %v695
        %v724 = vsel %vm723, %v720, %v695
        %vm725 = vcmp.lt.s32.totalorder %v722, %v724
        %v726 = vsel %vm725, %v722, %v724
        %v727 = vrot.slane %v726, 4
        %vm728 = vcmp.lt.s32.totalorder %v726, %v727
        %v729 = vsel %vm728, %v726, %v727
        %v730 = vrot.slane %v729, 2
        %vm731 = vcmp.lt.s32.totalorder %v729, %v730
        %v732 = vsel %vm731, %v729, %v730
        %v733 = vrot.slane %v732, 1
        %vm734 = vcmp.lt.s32.totalorder %v732, %v733
        %v735 = vsel %vm734, %v732, %v733
        %vm736 = vcmp.lt.s32.totalorder %v666, %v670
        %v737 = vsel %vm736, %v666, %v670
        %vm738 = vcmp.lt.s32.totalorder %v668, %v672
        %v739 = vsel %vm738, %v668, %v672
        %vm740 = vcmp.lt.s32.totalorder %v737, %v674
        %v741 = vsel %vm740, %v737, %v674
        %vm742 = vcmp.lt.s32.totalorder %v739, %v676
        %v743 = vsel %vm742, %v739, %v676
        %vm744 = vcmp.lt.s32.totalorder %v741, %v678
        %v745 = vsel %vm744, %v741, %v678
        %vm746 = vcmp.lt.s32.totalorder %v743, %v680
        %v747 = vsel %vm746, %v743, %v680
        %vm748 = vcmp.lt.s32.totalorder %v745, %v682
        %v749 = vsel %vm748, %v745, %v682
        %vm750 = vcmp.lt.s32.totalorder %v747, %v684
        %v751 = vsel %vm750, %v747, %v684
        %vm752 = vcmp.lt.s32.totalorder %v749, %v686
        %v753 = vsel %vm752, %v749, %v686
        %vm754 = vcmp.lt.s32.totalorder %v751, %v688
        %v755 = vsel %vm754, %v751, %v688
        %vm756 = vcmp.lt.s32.totalorder %v753, %v690
        %v757 = vsel %vm756, %v753, %v690
        %vm758 = vcmp.lt.s32.totalorder %v755, %v692
        %v759 = vsel %vm758, %v755, %v692
        %vm760 = vcmp.lt.s32.totalorder %v757, %v694
        %v761 = vsel %vm760, %v757, %v694
        %vm762 = vcmp.lt.s32.totalorder %v759, %v696
        %v763 = vsel %vm762, %v759, %v696
        %vm764 = vcmp.lt.s32.totalorder %v761, %v763
        %v765 = vsel %vm764, %v761, %v763
        %v766 = vrot.slane %v765, 4
        %vm767 = vcmp.lt.s32.totalorder %v765, %v766
        %v768 = vsel %vm767, %v765, %v766
        %v769 = vrot.slane %v768, 2
        %vm770 = vcmp.lt.s32.totalorder %v768, %v769
        %v771 = vsel %vm770, %v768, %v769
        %v772 = vrot.slane %v771, 1
        %vm773 = vcmp.lt.s32.totalorder %v771, %v772
        %v774 = vsel %vm773, %v771, %v772
        %v775 = vrot.slane %v774, 7
        %vm776 = vcmask 1040384
        %v777 = vsel %vm776, %v735, %v775
        %v778 = vlaneseq
        %vm779 = vcmp.ge.s32.totalorder %v778, 0
        %vm780 = vcmp.lt.s32.totalorder %v778, 256
        %vm781 = vmand %vm779, %vm780
        %782 = vst.msk [vmem:[%s216] sm:$0x3] %vm781, %v777
        %v783 = vmul.f32 %v241, %v241
        %785 = vst [vmem:[#allocation1] ss:$2 sm:$0xff] %v783
        %v786 = vld.sshfl [vmem:[#allocation1] sm:$0xff pattern:$0x75316420]
        %v787 = vld.sshfl [vmem:[#allocation1 + $0x8] sm:$0xff pattern:$0x75316420]
        %v790 = vsel %vm327, %v786, 0.0
        %v791 = vrot.slane %v790, 4
        %v792 = vadd.f32 %v790, %v791
        %v793 = vrot.slane %v792, 2
        %v794 = vadd.f32 %v792, %v793
        %v795 = vrot.slane %v794, 1
        %v796 = vadd.f32 %v794, %v795
        %v797 = vsel %vm327, %v787, 0.0
        %v798 = vrot.slane %v797, 4
        %v799 = vadd.f32 %v797, %v798
        %v800 = vrot.slane %v799, 2
        %v801 = vadd.f32 %v799, %v800
        %v802 = vrot.slane %v801, 1
        %v803 = vadd.f32 %v801, %v802
        %v804 = vadd.f32 %v796, %v594
        %v805 = vadd.f32 %v803, %v615
        %v806 = vld [vmem:[%s234] sm:$0x1]
        %v807 = vsel %vm776, %v804, 0.0
        %v808 = vsel %vm776, %v805, 0.0
        %v809 = vadd.f32 %v807, %v808
        %810 = vadd.xlane.f32.xlu0 %v809
        %v811 = vpop.xlane.xlu0 %810
        %v812 = vrot.slane %v811, 4
        %v813 = vadd.f32 %v811, %v812
        %v814 = vrot.slane %v813, 2
        %v815 = vadd.f32 %v813, %v814
        %v816 = vrot.slane %v815, 1
        %v817 = vadd.f32 %v815, %v816
        %s818 = vtos %v817
        %v819 = vstv %s818
        %v820 = vadd.f32 %v806, %v819
        %vm821 = vcmask 0
        %822 = vst.msk [vmem:[%s234] sm:$0x1] %vm821, %v820
        %s823 = sand.u32 %s111, 1
        %s824 = scalar_lea.sflag [#allocation3], %s823
        %s825 = sand.u32 %s111, 1
        %s826 = smul.addr %s825, 2
        %s827 = scalar_lea.vmem [#allocation2], %s826
        %p828 = scmp.lt.s32.totalorder %s23, 1
        %s829 = scalar_select %p828, %s23, 1
        %s830 = scalar_lea.vmem %s4, %s829
        // Predicated region
        $region37: #{tpu_custom_call.1} parent=31 // pred_check
          %p831 = pneg %p121
        $region38: #{tpu_custom_call.1} parent=31 // pred_check_branch
          %833 = sbr.rel (%p831) target = $region40
        $region39: #{tpu_custom_call.1} parent=31 // pred_region
          %835 = vsyncadd %s824, 0
          %s836 = smul.addr %s24, 2
          %s837 = smul.addr %s23, 2
          %s838 = sadd.s32 %s836, %s837
          %s839 = scalar_lea.hbm %s3, %s838
          %s841 = sshll.u32 %s827, 4
          %s842 = int_to_ptr.vmem [resolvable:$true] %s841
          %s843 = sshll.u32 %s839, 4
          %s844 = int_to_ptr.hbm [resolvable:$true] %s843
          %846 = dma.vmem_to_hbm [thread:$0]  %s842, 32, %s844, %s824
        $region40: #{tpu_custom_call.1} parent=31 // pred_fallthru
          _
        // Predicated region
        $region41: #{tpu_custom_call.1} parent=31 // pred_check
          %p847 = pneg %p147
        $region42: #{tpu_custom_call.1} parent=31 // pred_check_branch
          %849 = sbr.rel (%p847) target = $region44
        $region43: #{tpu_custom_call.1} parent=31 // pred_region
          _
        $region44: #{tpu_custom_call.1} parent=31 // pred_fallthru
          _
      $region32: #{tpu_custom_call.1} parent=5 // pred_fallthru
        _
      %p850 = scmp.le.s32.totalorder 2, %s14
      // Predicated region
      $region45: #{tpu_custom_call.1} parent=5 // pred_check
        %p851 = pneg %p850
      $region46: #{tpu_custom_call.1} parent=5 // pred_check_branch
        %853 = sbr.rel (%p851) target = $region48
      $region47: #{tpu_custom_call.1} parent=5 // pred_region
        %s854 = ssub.s32 %s14, 2
        // Predicated region
        $region49: #{tpu_custom_call.1} parent=47 // pred_check
          %p855 = pneg %p127
        $region50: #{tpu_custom_call.1} parent=47 // pred_check_branch
          %857 = sbr.rel (%p855) target = $region52
        $region51: #{tpu_custom_call.1} parent=47 // pred_region
          %s858 = sand.u32 %s112, 1
          %s859 = scalar_lea.sflag [#allocation3], %s858
          %s860 = sand.u32 %s112, 1
          %s861 = smul.addr %s860, 2
          %s862 = scalar_lea.vmem [#allocation2], %s861
          %864 = dma.done %s859, 32
        $region52: #{tpu_custom_call.1} parent=47 // pred_fallthru
          _
        // Predicated region
        $region53: #{tpu_custom_call.1} parent=47 // pred_check
          %p865 = pneg %p153
        $region54: #{tpu_custom_call.1} parent=47 // pred_check_branch
          %867 = sbr.rel (%p865) target = $region56
        $region55: #{tpu_custom_call.1} parent=47 // pred_region
          %p868 = scmp.lt.s32.totalorder %s25, 1
          %s869 = scalar_select %p868, %s25, 1
          %s870 = scalar_lea.vmem %s4, %s869
        $region56: #{tpu_custom_call.1} parent=47 // pred_fallthru
          _
      $region48: #{tpu_custom_call.1} parent=5 // pred_fallthru
        _
    $region6: #{tpu_custom_call.1} parent=1 // loop_footer
      %s18 = sadd.s32 1, %s14
    $region7: #{tpu_custom_call.1} parent=1 // loop_footer_branch
      %13 = sbr.rel target = $region3
    $region8: #{tpu_custom_call.1} parent=1 // loop_exit
      _
    %871 = vsyncpa [#allocation3], 1
    %s872 = scalar_lea.sflag [#allocation3], 1
    %873 = vsyncpa %s872, 1

</llo_original>
